<compile_context>
chip_gen: v7x
topology: tpu7x:2x2x1
jax: 0.10.0
libtpu: 0.0.40
codegen_flags: <defaults>
</compile_context>

<pallas_src>
import functools

import jax
import jax.numpy as jnp
from jax.experimental import pallas as pl
from jax.experimental.pallas import tpu as pltpu


def _round_up(x, m):
    return ((x + m - 1) // m) * m


def _listmle_kernel(preds_ref, ytrue_ref, out_ref, *, eps, pad, total_b):
    """One batch tile: [TB, Lp] rows already sorted by y_true (descending)."""
    pid = pl.program_id(0)

    @pl.when(pid == 0)
    def _init():
        out_ref[...] = jnp.zeros_like(out_ref)

    preds = preds_ref[...]                      # [TB, Lp] f32
    ytrue = ytrue_ref[...]                      # [TB, Lp] f32
    tb, lp = preds.shape

    mask = ytrue == jnp.float32(pad)            # padded entries (incl. lane/row padding)
    neg_big = jnp.float32(-1e30)                # finite sentinel: avoids inf-inf NaNs
    preds_m = jnp.where(mask, neg_big, preds)

    max_v = jnp.max(preds_m, axis=-1, keepdims=True)          # [TB, 1]
    shifted = preds_m - max_v                                  # [TB, Lp]
    expv = jnp.where(mask, jnp.float32(0.0), jnp.exp(shifted)) # exact 0 at pads

    # Reverse inclusive cumulative sum along lanes:
    #   cums[b, i] = sum_{j >= i} expv[b, j]
    # via a Hillis-Steele scan: ceil(log2(Lp)) pltpu.roll (XLU slot) + masked adds.
    lane = jax.lax.broadcasted_iota(jnp.int32, (tb, lp), 1)
    cums = expv
    d = 1
    while d < lp:
        # rolled[i] = cums[(i + d) % Lp]; mask out wrapped-around lanes.
        rolled = pltpu.roll(cums, shift=lp - d, axis=1)
        cums = cums + jnp.where(lane < (lp - d), rolled, jnp.float32(0.0))
        d *= 2

    obs = jnp.log(cums + jnp.float32(eps)) - shifted
    obs = jnp.where(mask, jnp.float32(0.0), obs)

    partial = jnp.sum(jnp.sum(obs, axis=-1, keepdims=True), axis=0, keepdims=True)  # [1,1]
    out_ref[...] += partial                     # resident accumulator across the grid

    @pl.when(pid == pl.num_programs(0) - 1)
    def _finalize():
        out_ref[...] = out_ref[...] / jnp.float32(total_b)    # divide by *global* B


def relaxed_listmle(y_pred, y_true, key, *, eps=1e-8, pad=-1.0, batch_tile=256):
    """JAX/Pallas equivalent of RelaxedListMLE.forward (torch.randperm -> jax PRNG)."""
    y_pred = y_pred.astype(jnp.float32)
    y_true = y_true.astype(jnp.float32)
    B, L = y_pred.shape

    # --- glue: random shuffle + descending sort of y_true + gather of y_pred ---
    # TODO(synk): fuse the two take_along_axis gathers into the kernel (scalar-prefetched
    # `order` + in-kernel lane gather) to cut the extra HBM passes XLA makes here.
    perm = jax.random.permutation(key, L)
    y_pred_s = y_pred[:, perm]
    y_true_s = y_true[:, perm]
    order = jnp.argsort(-y_true_s, axis=-1)                      # descending
    y_true_sorted = jnp.take_along_axis(y_true_s, order, axis=-1)
    preds_sorted = jnp.take_along_axis(y_pred_s, order, axis=-1)

    # --- pad to TPU-friendly shapes: lanes multiple of 128, sublanes multiple of 8 ---
    Lp = _round_up(L, 128)
    # Per-input, per-pipeline-buffer VMEM budget: keeps 2 inputs x 2 buffers at <=16 MiB,
    # comfortably under the 32 MiB scoped default and v7x's 64 MiB physical VMEM.
    tile_budget_bytes = 4 * 1024 * 1024
    tb_cap = max(8, (tile_budget_bytes // (Lp * 4)) // 8 * 8)
    TB = int(min(batch_tile, tb_cap, _round_up(B, 8)))
    Bp = _round_up(B, TB)

    preds_p = jnp.zeros((Bp, Lp), jnp.float32).at[:B, :L].set(preds_sorted)
    ytrue_p = jnp.full((Bp, Lp), pad, dtype=jnp.float32).at[:B, :L].set(y_true_sorted)

    kernel = functools.partial(_listmle_kernel, eps=eps, pad=pad, total_b=B)
    out = pl.pallas_call(
        kernel,
        out_shape=jax.ShapeDtypeStruct((1, 1), jnp.float32),
        grid=(Bp // TB,),
        in_specs=[
            pl.BlockSpec((TB, Lp), lambda i: (i, 0)),
            pl.BlockSpec((TB, Lp), lambda i: (i, 0)),
        ],
        out_specs=pl.BlockSpec((1, 1), lambda i: (0, 0)),
        compiler_params=pltpu.CompilerParams(
            # Batch axis is a reduction into the resident (1,1) accumulator.
            dimension_semantics=("arbitrary",),
        ),
    )(preds_p, ytrue_p)
    return out[0, 0]


def _reference(y_pred, y_true, key, *, eps=1e-8, pad=-1.0):
    """Pure-JAX reference (mirrors the PyTorch forward exactly)."""
    y_pred = y_pred.astype(jnp.float32)
    y_true = y_true.astype(jnp.float32)
    L = y_pred.shape[-1]
    perm = jax.random.permutation(key, L)
    y_pred_s = y_pred[:, perm]
    y_true_s = y_true[:, perm]
    order = jnp.argsort(-y_true_s, axis=-1)
    y_true_sorted = jnp.take_along_axis(y_true_s, order, axis=-1)
    preds = jnp.take_along_axis(y_pred_s, order, axis=-1)
    mask = y_true_sorted == pad
    preds = jnp.where(mask, -jnp.inf, preds)
    max_v = jnp.max(preds, axis=1, keepdims=True)
    shifted = preds - max_v
    cums = jnp.flip(jnp.cumsum(jnp.flip(jnp.exp(shifted), axis=1), axis=1), axis=1)
    obs = jnp.log(cums + eps) - shifted
    obs = jnp.where(mask, 0.0, obs)
    return jnp.mean(jnp.sum(obs, axis=1))


if __name__ == "__main__":
    key = jax.random.PRNGKey(0)
    k_pred, k_true, k_perm = jax.random.split(key, 3)

    B, L = 2, 8
    y_pred = jax.random.normal(k_pred, (B, L), dtype=jnp.float32)
    # integer relevance labels in [0, 4], with a couple of pad (-1) entries
    y_true = jax.random.randint(k_true, (B, L), 0, 5).astype(jnp.float32)
    y_true = y_true.at[0, -2:].set(-1.0)
    y_true = y_true.at[1, -1:].set(-1.0)

    loss = relaxed_listmle(y_pred, y_true, k_perm, eps=1e-8, pad=-1.0)
    loss = jax.block_until_ready(loss)

    ref = _reference(y_pred, y_true, k_perm, eps=1e-8, pad=-1.0)
    assert jnp.allclose(loss, ref, rtol=1e-5, atol=1e-5), (loss, ref)

    print("KERNEL_OK")
</pallas_src>

<mosaic_0001>
module attributes {stable_mosaic.version = 11 : i64} {
  func.func @_listmle_kernel(%arg0: i32, %arg1: memref<8x128xf32, #tpu.memory_space<vmem>>, %arg2: memref<8x128xf32, #tpu.memory_space<vmem>>, %arg3: memref<1x1xf32, #tpu.memory_space<vmem>>) attributes {dimension_semantics = [#tpu.dimension_semantics<arbitrary>], iteration_bounds = array<i64: 1>, scalar_prefetch = 0 : i64, scratch_operands = 0 : i64, tpu.core_type = #tpu.core_type<tc>, window_params = [{transform_indices = @transform_0, window_bounds = array<i64: 8, 128>}, {transform_indices = @transform_1, window_bounds = array<i64: 8, 128>}, {pipeline_mode = #tpu.pipeline_mode<synchronous>, transform_indices = @transform_2, window_bounds = array<i64: 1, 1>}]} {
    %c0_i32 = arith.constant 0 : i32
    %0 = arith.cmpi eq, %arg0, %c0_i32 : i32
    %1 = arith.extui %0 : i1 to i32
    %c0_i32_0 = arith.constant 0 : i32
    %2 = arith.cmpi ne, %1, %c0_i32_0 : i32
    scf.if %2 {
      %cst_31 = arith.constant 0.000000e+00 : f32
      %75 = vector.broadcast %cst_31 : f32 to vector<1x1xf32>
      %c0_32 = arith.constant 0 : index
      %c0_33 = arith.constant 0 : index
      %76 = vector.load %arg3[%c0_32, %c0_33] : memref<1x1xf32, #tpu.memory_space<vmem>>, vector<1x1xf32>
      tpu.vector_store %arg3[%c0_32, %c0_33], %75 {strides = array<i32>} : memref<1x1xf32, #tpu.memory_space<vmem>>, vector<1x1xf32>,
    } else {
    }
    %c0 = arith.constant 0 : index
    %c0_1 = arith.constant 0 : index
    %3 = vector.load %arg1[%c0, %c0_1] : memref<8x128xf32, #tpu.memory_space<vmem>>, vector<8x128xf32>
    %c0_2 = arith.constant 0 : index
    %c0_3 = arith.constant 0 : index
    %4 = vector.load %arg2[%c0_2, %c0_3] : memref<8x128xf32, #tpu.memory_space<vmem>>, vector<8x128xf32>
    %cst = arith.constant -1.000000e+00 : f32
    %5 = vector.broadcast %cst : f32 to vector<8x128xf32>
    %6 = arith.cmpf oeq, %4, %5 : vector<8x128xf32>
    %cst_4 = arith.constant -1.000000e+30 : f32
    %7 = vector.broadcast %cst_4 : f32 to vector<8x128xf32>
    %8 = arith.select %6, %7, %3 : vector<8x128xi1>, vector<8x128xf32>
    %cst_5 = arith.constant dense<0xFF800000> : vector<8xf32>
    %9 = vector.multi_reduction <maximumf>, %8, %cst_5 [1] : vector<8x128xf32> to vector<8xf32>
    %10 = vector.shape_cast %9 : vector<8xf32> to vector<8x1xf32>
    %11 = vector.broadcast %10 : vector<8x1xf32> to vector<8x128xf32>
    %12 = arith.subf %8, %11 : vector<8x128xf32>
    %13 = math.exp %12 : vector<8x128xf32>
    %cst_6 = arith.constant 0.000000e+00 : f32
    %14 = vector.broadcast %cst_6 : f32 to vector<8x128xf32>
    %15 = arith.select %6, %14, %13 : vector<8x128xi1>, vector<8x128xf32>
    %16 = tpu.iota {dimensions = array<i32: 1>} : vector<8x128xi32>
    %c127_i32 = arith.constant 127 : i32
    %17 = tpu.dynamic_rotate %15 by %c127_i32 dim 1 : vector<8x128xf32>, i32 -> vector<8x128xf32>
    %c127_i32_7 = arith.constant 127 : i32
    %18 = vector.broadcast %c127_i32_7 : i32 to vector<8x128xi32>
    %19 = arith.cmpi slt, %16, %18 : vector<8x128xi32>
    %cst_8 = arith.constant 0.000000e+00 : f32
    %20 = vector.broadcast %cst_8 : f32 to vector<8x128xf32>
    %21 = arith.select %19, %17, %20 : vector<8x128xi1>, vector<8x128xf32>
    %22 = arith.addf %15, %21 : vector<8x128xf32>
    %c126_i32 = arith.constant 126 : i32
    %23 = tpu.dynamic_rotate %22 by %c126_i32 dim 1 : vector<8x128xf32>, i32 -> vector<8x128xf32>
    %c126_i32_9 = arith.constant 126 : i32
    %24 = vector.broadcast %c126_i32_9 : i32 to vector<8x128xi32>
    %25 = arith.cmpi slt, %16, %24 : vector<8x128xi32>
    %cst_10 = arith.constant 0.000000e+00 : f32
    %26 = vector.broadcast %cst_10 : f32 to vector<8x128xf32>
    %27 = arith.select %25, %23, %26 : vector<8x128xi1>, vector<8x128xf32>
    %28 = arith.addf %22, %27 : vector<8x128xf32>
    %c124_i32 = arith.constant 124 : i32
    %29 = tpu.dynamic_rotate %28 by %c124_i32 dim 1 : vector<8x128xf32>, i32 -> vector<8x128xf32>
    %c124_i32_11 = arith.constant 124 : i32
    %30 = vector.broadcast %c124_i32_11 : i32 to vector<8x128xi32>
    %31 = arith.cmpi slt, %16, %30 : vector<8x128xi32>
    %cst_12 = arith.constant 0.000000e+00 : f32
    %32 = vector.broadcast %cst_12 : f32 to vector<8x128xf32>
    %33 = arith.select %31, %29, %32 : vector<8x128xi1>, vector<8x128xf32>
    %34 = arith.addf %28, %33 : vector<8x128xf32>
    %c120_i32 = arith.constant 120 : i32
    %35 = tpu.dynamic_rotate %34 by %c120_i32 dim 1 : vector<8x128xf32>, i32 -> vector<8x128xf32>
    %c120_i32_13 = arith.constant 120 : i32
    %36 = vector.broadcast %c120_i32_13 : i32 to vector<8x128xi32>
    %37 = arith.cmpi slt, %16, %36 : vector<8x128xi32>
    %cst_14 = arith.constant 0.000000e+00 : f32
    %38 = vector.broadcast %cst_14 : f32 to vector<8x128xf32>
    %39 = arith.select %37, %35, %38 : vector<8x128xi1>, vector<8x128xf32>
    %40 = arith.addf %34, %39 : vector<8x128xf32>
    %c112_i32 = arith.constant 112 : i32
    %41 = tpu.dynamic_rotate %40 by %c112_i32 dim 1 : vector<8x128xf32>, i32 -> vector<8x128xf32>
    %c112_i32_15 = arith.constant 112 : i32
    %42 = vector.broadcast %c112_i32_15 : i32 to vector<8x128xi32>
    %43 = arith.cmpi slt, %16, %42 : vector<8x128xi32>
    %cst_16 = arith.constant 0.000000e+00 : f32
    %44 = vector.broadcast %cst_16 : f32 to vector<8x128xf32>
    %45 = arith.select %43, %41, %44 : vector<8x128xi1>, vector<8x128xf32>
    %46 = arith.addf %40, %45 : vector<8x128xf32>
    %c96_i32 = arith.constant 96 : i32
    %47 = tpu.dynamic_rotate %46 by %c96_i32 dim 1 : vector<8x128xf32>, i32 -> vector<8x128xf32>
    %c96_i32_17 = arith.constant 96 : i32
    %48 = vector.broadcast %c96_i32_17 : i32 to vector<8x128xi32>
    %49 = arith.cmpi slt, %16, %48 : vector<8x128xi32>
    %cst_18 = arith.constant 0.000000e+00 : f32
    %50 = vector.broadcast %cst_18 : f32 to vector<8x128xf32>
    %51 = arith.select %49, %47, %50 : vector<8x128xi1>, vector<8x128xf32>
    %52 = arith.addf %46, %51 : vector<8x128xf32>
    %c64_i32 = arith.constant 64 : i32
    %53 = tpu.dynamic_rotate %52 by %c64_i32 dim 1 : vector<8x128xf32>, i32 -> vector<8x128xf32>
    %c64_i32_19 = arith.constant 64 : i32
    %54 = vector.broadcast %c64_i32_19 : i32 to vector<8x128xi32>
    %55 = arith.cmpi slt, %16, %54 : vector<8x128xi32>
    %cst_20 = arith.constant 0.000000e+00 : f32
    %56 = vector.broadcast %cst_20 : f32 to vector<8x128xf32>
    %57 = arith.select %55, %53, %56 : vector<8x128xi1>, vector<8x128xf32>
    %58 = arith.addf %52, %57 : vector<8x128xf32>
    %cst_21 = arith.constant 9.99999993E-9 : f32
    %59 = vector.broadcast %cst_21 : f32 to vector<8x128xf32>
    %60 = arith.addf %58, %59 : vector<8x128xf32>
    %61 = math.log %60 : vector<8x128xf32>
    %62 = arith.subf %61, %12 : vector<8x128xf32>
    %cst_22 = arith.constant 0.000000e+00 : f32
    %63 = vector.broadcast %cst_22 : f32 to vector<8x128xf32>
    %64 = arith.select %6, %63, %62 : vector<8x128xi1>, vector<8x128xf32>
    %cst_23 = arith.constant dense<0.000000e+00> : vector<8xf32>
    %65 = vector.multi_reduction <add>, %64, %cst_23 [1] : vector<8x128xf32> to vector<8xf32>
    %66 = vector.shape_cast %65 : vector<8xf32> to vector<8x1xf32>
    %cst_24 = arith.constant dense<0.000000e+00> : vector<1xf32>
    %67 = vector.multi_reduction <add>, %66, %cst_24 [0] : vector<8x1xf32> to vector<1xf32>
    %68 = vector.shape_cast %67 : vector<1xf32> to vector<1x1xf32>
    %c0_25 = arith.constant 0 : index
    %c0_26 = arith.constant 0 : index
    %69 = vector.load %arg3[%c0_25, %c0_26] : memref<1x1xf32, #tpu.memory_space<vmem>>, vector<1x1xf32>
    %70 = arith.addf %69, %68 : vector<1x1xf32>
    %c0_27 = arith.constant 0 : index
    %c0_28 = arith.constant 0 : index
    %71 = vector.load %arg3[%c0_27, %c0_28] : memref<1x1xf32, #tpu.memory_space<vmem>>, vector<1x1xf32>
    tpu.vector_store %arg3[%c0_27, %c0_28], %70 {strides = array<i32>} : memref<1x1xf32, #tpu.memory_space<vmem>>, vector<1x1xf32>,
    %c0_i32_29 = arith.constant 0 : i32
    %72 = arith.cmpi eq, %arg0, %c0_i32_29 : i32
    %73 = arith.extui %72 : i1 to i32
    %c0_i32_30 = arith.constant 0 : i32
    %74 = arith.cmpi ne, %73, %c0_i32_30 : i32
    scf.if %74 {
      %c0_31 = arith.constant 0 : index
      %c0_32 = arith.constant 0 : index
      %75 = vector.load %arg3[%c0_31, %c0_32] : memref<1x1xf32, #tpu.memory_space<vmem>>, vector<1x1xf32>
      %cst_33 = arith.constant 2.000000e+00 : f32
      %76 = vector.broadcast %cst_33 : f32 to vector<1x1xf32>
      %77 = arith.divf %75, %76 : vector<1x1xf32>
      %c0_34 = arith.constant 0 : index
      %c0_35 = arith.constant 0 : index
      %78 = vector.load %arg3[%c0_34, %c0_35] : memref<1x1xf32, #tpu.memory_space<vmem>>, vector<1x1xf32>
      tpu.vector_store %arg3[%c0_34, %c0_35], %77 {strides = array<i32>} : memref<1x1xf32, #tpu.memory_space<vmem>>, vector<1x1xf32>,
    } else {
    }
    return
  }
  func.func @transform_0(%arg0: i32) -> (i32, i32) {
    %c0_i32 = arith.constant 0 : i32
    %c0_i32_0 = arith.constant 0 : i32
    return %arg0, %c0_i32 : i32, i32
  }
  func.func @transform_1(%arg0: i32) -> (i32, i32) {
    %c0_i32 = arith.constant 0 : i32
    %c0_i32_0 = arith.constant 0 : i32
    return %arg0, %c0_i32 : i32, i32
  }
  func.func @transform_2(%arg0: i32) -> (i32, i32) {
    %c0_i32 = arith.constant 0 : i32
    %c0_i32_0 = arith.constant 0 : i32
    %c0_i32_1 = arith.constant 0 : i32
    return %c0_i32, %c0_i32_0 : i32, i32
  }
}

</mosaic_0001>

<llo_original>
// kernel: tpu_custom_call.1
$region0: #{tpu_custom_call.1}
  #allocation0 [shape = 'u32[]', space=smem, size = 0x4, offset = 0x4, fixed_abs, tag = 'smem constant byte address 0x4 - core index']
  #allocation1 [shape = 'u32[144,128]{1,0:T(1,128)}', space=vmem, size = 0x12000, scoped, tag = 'internal scratch']
  %s0 = inlined_call_operand.hbm [shape: f32[8,128], index: 0, kind: input, shape index: {}]
  %s1 = inlined_call_operand.hbm [shape: f32[8,128], index: 1, kind: input, shape index: {}]
  %s2 = inlined_call_operand.hbm [shape: f32[1,1], index: 2, kind: output, shape index: {}]
  %s3 = sld [smem:[#allocation0]]
  $region34: #{tpu_custom_call.1} parent=0
    _
  %s5 = ssub.s32 1, %s3
  %s6 = scalar_select 0, %s5, %s3
  $region1: #{tpu_custom_call.1} parent=0
    #allocation2 [shape = 'u8[4096]{0}', space=vmem, size = 0x1000, scoped, tag = 'input window, operand 0, single buffered']
    #allocation3 [shape = 's32[1]{0}', space=sflag, size = 0x4, scoped, tag = 'scoped memory for tpu_custom_call.1']
    #allocation4 [shape = 's32[1]{0}', space=sflag, size = 0x4, scoped, tag = 'scoped memory for tpu_custom_call.1']
    #allocation5 [shape = 'u8[4096]{0}', space=vmem, size = 0x1000, scoped, tag = 'input window, operand 1, single buffered']
    #allocation6 [shape = 's32[1]{0}', space=sflag, size = 0x4, scoped, tag = 'scoped memory for tpu_custom_call.1']
    #allocation7 [shape = 'u8[512]{0}', space=vmem, size = 0x400, scoped, tag = 'output window, operand 0, single buffered']
    %7 = vsyncpa [#allocation3], 0
    %8 = vsyncpa [#allocation6], 0
    %9 = vsyncpa [#allocation4], 0
    // Predicated region
    $region2: #{tpu_custom_call.1} parent=1 // pred_check
      _
    $region3: #{tpu_custom_call.1} parent=1 // pred_check_branch
      %11 = sbr.rel (0) target = $region5
    $region4: #{tpu_custom_call.1} parent=1 // pred_region
      %s13 = ssub.s32 128, 128
      %14 = vsyncadd [#allocation3], %s13
      %s16 = sshll.u32 [#allocation2], 4
      %s17 = int_to_ptr.vmem [resolvable:$true] %s16
      %19 = dma.hbm_to_vmem [thread:$0]  %s0, 128, %s17, [#allocation3]
    $region5: #{tpu_custom_call.1} parent=1 // pred_fallthru
      _
    // Predicated region
    $region6: #{tpu_custom_call.1} parent=1 // pred_check
      _
    $region7: #{tpu_custom_call.1} parent=1 // pred_check_branch
      %21 = sbr.rel (0) target = $region9
    $region8: #{tpu_custom_call.1} parent=1 // pred_region
      %s23 = ssub.s32 128, 128
      %24 = vsyncadd [#allocation6], %s23
      %s26 = sshll.u32 [#allocation5], 4
      %s27 = int_to_ptr.vmem [resolvable:$true] %s26
      %29 = dma.hbm_to_vmem [thread:$0]  %s1, 128, %s27, [#allocation6]
    $region9: #{tpu_custom_call.1} parent=1 // pred_fallthru
      _
    // Predicated region
    $region10: #{tpu_custom_call.1} parent=1 // pred_check
      _
    $region11: #{tpu_custom_call.1} parent=1 // pred_check_branch
      %31 = sbr.rel (0) target = $region13
    $region12: #{tpu_custom_call.1} parent=1 // pred_region
      %32 = dma.done [#allocation3], 128
    $region13: #{tpu_custom_call.1} parent=1 // pred_fallthru
      _
    // Predicated region
    $region14: #{tpu_custom_call.1} parent=1 // pred_check
      _
    $region15: #{tpu_custom_call.1} parent=1 // pred_check_branch
      %34 = sbr.rel (0) target = $region17
    $region16: #{tpu_custom_call.1} parent=1 // pred_region
      %35 = dma.done [#allocation6], 128
    $region17: #{tpu_custom_call.1} parent=1 // pred_fallthru
      _
    %p36 = scmp.eq.s32.totalorder 0, 0
    // Predicated region
    $region18: #{tpu_custom_call.1} parent=1 // pred_check
      %p37 = pneg %p36
    $region19: #{tpu_custom_call.1} parent=1 // pred_check_branch
      %39 = sbr.rel (%p37) target = $region21
    $region20: #{tpu_custom_call.1} parent=1 // pred_region
      %vm40 = vcmask 0
      %41 = vst.msk [vmem:[#allocation7] sm:$0x1] %vm40, 0.0
    $region21: #{tpu_custom_call.1} parent=1 // pred_fallthru
      _
    %v42 = vld [vmem:[#allocation2] sm:$0xff]
    %v43 = vld [vmem:[#allocation5] sm:$0xff]
    %vm44 = vcmp.eq.f32.partialorder %v43, -1.0
    %v45 = vsel %vm44, -1e+30, %v42
    %46 = vmax.xlane.f32.xlu0 %v45
    %v47 = vpop.xlane.xlu0 %46
    %v48 = vsub.f32 %v45, %v47
    %v49 = vmul.f32 %v48, 1.442695
    %v50 = vpow.pop %v49
    %v51 = vsel %vm44, 0.0, %v50
    %v52 = vlaneseq
    %v53 = vand.u32 %v52, 127
    %54 = vrot.lane.b32.xlu0 %v51, 127
    %v55 = vpop.permute.xlu0 %54
    %vm56 = vcmp.lt.s32.totalorder %v53, 127
    %v57 = vsel %vm56, %v55, 0.0
    %v58 = vadd.f32 %v51, %v57
    %59 = vrot.lane.b32.xlu0 %v58, 126
    %v60 = vpop.permute.xlu0 %59
    %vm61 = vcmp.lt.s32.totalorder %v53, 126
    %v62 = vsel %vm61, %v60, 0.0
    %v63 = vadd.f32 %v58, %v62
    %64 = vrot.lane.b32.xlu0 %v63, 124
    %v65 = vpop.permute.xlu0 %64
    %vm66 = vcmp.lt.s32.totalorder %v53, 124
    %v67 = vsel %vm66, %v65, 0.0
    %v68 = vadd.f32 %v63, %v67
    %69 = vrot.lane.b32.xlu0 %v68, 120
    %v70 = vpop.permute.xlu0 %69
    %vm71 = vcmp.lt.s32.totalorder %v53, 120
    %v72 = vsel %vm71, %v70, 0.0
    %v73 = vadd.f32 %v68, %v72
    %74 = vrot.lane.b32.xlu0 %v73, 112
    %v75 = vpop.permute.xlu0 %74
    %vm76 = vcmp.lt.s32.totalorder %v53, 112
    %v77 = vsel %vm76, %v75, 0.0
    %v78 = vadd.f32 %v73, %v77
    %79 = vrot.lane.b32.xlu0 %v78, 96
    %v80 = vpop.permute.xlu0 %79
    %vm81 = vcmp.lt.s32.totalorder %v53, 96
    %v82 = vsel %vm81, %v80, 0.0
    %v83 = vadd.f32 %v78, %v82
    %84 = vrot.lane.b32.xlu0 %v83, 64
    %v85 = vpop.permute.xlu0 %84
    %vm86 = vcmp.lt.s32.totalorder %v53, 64
    %v87 = vsel %vm86, %v85, 0.0
    %v88 = vadd.f32 %v83, %v87
    %v89 = vadd.f32 %v88, 1e-08
    %v90 = vlog2.pop %v89
    %v91 = vmul.f32 %v90, 0.6931472
    %v92 = vsub.f32 %v91, %v48
    %v93 = vsel %vm44, 0.0, %v92
    %94 = vadd.xlane.f32.xlu0 %v93
    %v95 = vpop.xlane.xlu0 %94
    %v96 = vrot.slane %v95, 4
    %v97 = vadd.f32 %v95, %v96
    %v98 = vrot.slane %v97, 2
    %v99 = vadd.f32 %v97, %v98
    %v100 = vrot.slane %v99, 1
    %v101 = vadd.f32 %v99, %v100
    %v102 = vld [vmem:[#allocation7] sm:$0x1]
    %v103 = vadd.f32 %v102, %v101
    %vm104 = vcmask 0
    %105 = vst.msk [vmem:[#allocation7] sm:$0x1] %vm104, %v103
    // Predicated region
    $region22: #{tpu_custom_call.1} parent=1 // pred_check
      %p106 = pneg %p36
    $region23: #{tpu_custom_call.1} parent=1 // pred_check_branch
      %108 = sbr.rel (%p106) target = $region25
    $region24: #{tpu_custom_call.1} parent=1 // pred_region
      %v109 = vld [vmem:[#allocation7] sm:$0x1]
      %v110 = vrcp.pop 2.0
      %v111 = vmul.f32 %v109, %v110
      %112 = vst.msk [vmem:[#allocation7] sm:$0x1] %vm104, %v111
    $region25: #{tpu_custom_call.1} parent=1 // pred_fallthru
      _
    // Predicated region
    $region26: #{tpu_custom_call.1} parent=1 // pred_check
      _
    $region27: #{tpu_custom_call.1} parent=1 // pred_check_branch
      %114 = sbr.rel (0) target = $region29
    $region28: #{tpu_custom_call.1} parent=1 // pred_region
      %s116 = ssub.s32 16, 16
      %117 = vsyncadd [#allocation4], %s116
      %s119 = sshll.u32 [#allocation7], 4
      %s120 = int_to_ptr.vmem [resolvable:$true] %s119
      %122 = dma.vmem_to_hbm [thread:$0]  %s120, 16, %s2, [#allocation4]
    $region29: #{tpu_custom_call.1} parent=1 // pred_fallthru
      _
    // Predicated region
    $region30: #{tpu_custom_call.1} parent=1 // pred_check
      _
    $region31: #{tpu_custom_call.1} parent=1 // pred_check_branch
      %124 = sbr.rel (0) target = $region33
    $region32: #{tpu_custom_call.1} parent=1 // pred_region
      %125 = dma.done [#allocation4], 16
    $region33: #{tpu_custom_call.1} parent=1 // pred_fallthru
      _
    %126 = vsyncpa [#allocation3], 1
    %127 = vsyncpa [#allocation6], 1
    %128 = vsyncpa [#allocation4], 1

</llo_original>
